<compile_context>
chip_gen: v7x
topology: tpu7x:2x2x1
jax: 0.10.0
libtpu: 0.0.40
codegen_flags: <defaults>
</compile_context>

<pallas_src>
import functools

import numpy as np

import jax
import jax.numpy as jnp
from jax.experimental import pallas as pl
from jax.experimental.pallas import tpu as pltpu

BN_EPS = 1e-5


# ---------------------------------------------------------------------------
# In-kernel helpers
# ---------------------------------------------------------------------------
def _pool3x3_s1(y, h_pos, w_pos, *, C, mode):
    """3x3, stride-1, pad-1 pooling of a lane-dense (rows, W*C) tile.

    h_pos: (rows, 1) f32 -- h coordinate of each row (blocks hold whole images).
    w_pos: (1, L)    f32 -- w coordinate of each lane (lane = w*C + c).
    Neighbor shifts go through pltpu.roll (XLU slot, effectively free next to the
    VPU work); validity masks and the count_include_pad=False divisors come from
    rolling the position vectors alongside the data.
    """
    is_max = mode == "max"
    fill = jnp.float32(-jnp.inf) if is_max else jnp.float32(0.0)
    comb = jnp.maximum if is_max else jnp.add

    def one_axis(v, pos, axis, step):
        n = v.shape[axis]
        fwd = step % n
        bwd = (n - step) % n
        shifts = []
        if fwd != 0:
            shifts.append(fwd)
        if bwd != 0 and bwd != fwd:          # degenerate extents (W<=2) dedup
            shifts.append(bwd)
        acc = v
        cnt = jnp.ones_like(pos)
        for sh in shifts:
            vv = pltpu.roll(v, sh, axis=axis)
            pp = pltpu.roll(pos, sh, axis=axis)
            ok = jnp.abs(pp - pos) == 1.0    # true +-1 neighbor inside the image
            acc = comb(acc, jnp.where(ok, vv, fill))
            cnt = cnt + ok.astype(jnp.float32)
        return acc, cnt

    s, cw = one_axis(y, w_pos, axis=1, step=C)      # W direction (lane stride C)
    out, ch = one_axis(s, h_pos, axis=0, step=1)    # H direction (row stride 1)
    if not is_max:
        out = out * (1.0 / cw) * (1.0 / ch)          # count_include_pad=False
    return out


def _lane_group_sum(v, W, C):
    """Per-channel totals broadcast back to every w replica.

    v: (1, W*C).  Returns (1, W*C) where lane l holds sum_w v[0, w*C + (l % C)].
    log2(W) roll-and-add tree for power-of-two W (else W-1 rolls); single-vreg work.
    """
    L = W * C
    if W <= 1:
        return v
    if W & (W - 1) == 0:
        step = C
        while step < L:
            v = v + pltpu.roll(v, step, axis=1)
            step *= 2
        return v
    acc = v
    for j in range(1, W):
        acc = acc + pltpu.roll(v, (j * C) % L, axis=1)
    return acc


# ---------------------------------------------------------------------------
# Kernels
# ---------------------------------------------------------------------------
def _pool_only_kernel(h_pos_ref, w_pos_ref, x_ref, out_ref, *, C, mode):
    # Identity preprocess (C_in == C_out): just pool the block.
    out_ref[...] = _pool3x3_s1(x_ref[...], h_pos_ref[...], w_pos_ref[...],
                               C=C, mode=mode)


def _pre_pool_kernel(h_pos_ref, w_pos_ref, x_ref, w_ref, gamma_ref, beta_ref,
                     out_ref, sum_ref, sq_ref, *, W, Cout, mode, inv_count):
    phase = pl.program_id(0)   # 0: accumulate BN stats, 1: normalize + pool
    blk = pl.program_id(1)

    # ReLU -> 1x1 conv.  kron(I_W, w) keeps the lane-dense layout; recomputed in both
    # phases (cheaper than stashing y in VMEM/HBM across the phase boundary).
    x = jnp.maximum(x_ref[...], 0.0).astype(w_ref.dtype)
    y = jnp.dot(x, w_ref[...], preferred_element_type=jnp.float32)   # (rows, W*Cout)

    @pl.when((phase == 0) & (blk == 0))
    def _init():
        sum_ref[...] = jnp.zeros_like(sum_ref)
        sq_ref[...] = jnp.zeros_like(sq_ref)

    @pl.when(phase == 0)
    def _accumulate():
        sum_ref[...] += jnp.sum(y, axis=0, keepdims=True)
        sq_ref[...] += jnp.sum(y * y, axis=0, keepdims=True)

    @pl.when(phase == 1)
    def _normalize_and_pool():
        # Per-channel batch statistics (biased variance), broadcast back to every
        # w replica via a log2(W) roll-and-add tree -- no selection matmuls.
        s_tot = _lane_group_sum(sum_ref[...], W, Cout)
        q_tot = _lane_group_sum(sq_ref[...], W, Cout)
        mean = s_tot * inv_count
        # TODO(synk): E[x^2]-E[x]^2 can cancel when |mean| >> std; the clamp keeps
        # rsqrt finite.  A centered second pass / Welford would be more robust.
        var = jnp.maximum(q_tot * inv_count - mean * mean, 0.0)
        scale = gamma_ref[...] * jax.lax.rsqrt(var + BN_EPS)         # (1, L)
        shift = beta_ref[...] - mean * scale
        out_ref[...] = _pool3x3_s1(y * scale + shift,
                                   h_pos_ref[...], w_pos_ref[...],
                                   C=Cout, mode=mode)


# ---------------------------------------------------------------------------
# Wrapper
# ---------------------------------------------------------------------------
def _pick_block_images(N, H, L, itemsize=4):
    """Largest divisor of N whose block (nb*H rows) keeps rows % 8 == 0 and the block
    under a few MiB, so double-buffered in/out blocks sit comfortably inside scoped
    VMEM on v5e / v6e / v7x."""
    target_rows = max(8, min(512, (4 * 1024 * 1024) // max(1, itemsize * L)))
    cands = [nb for nb in range(1, N + 1)
             if N % nb == 0 and (nb * H) % 8 == 0 and nb * H <= target_rows]
    return max(cands) if cands else N


def pooling_forward(x_nchw, params, *, mode, stride=1, block_images=None,
                    conv_dtype=jnp.float32):
    """POOLING forward.  x_nchw: (N, C_in, H, W), params None or {'w','gamma','beta'}."""
    if stride != 1:
        # TODO(synk): stride != 1 (strided pooling output) is not implemented.
        raise NotImplementedError("only stride == 1 is implemented")
    if mode not in ("avg", "max"):
        raise ValueError(f"invalid mode={mode}")

    N, Cin, H, W = x_nchw.shape
    has_pre = params is not None
    Cout = int(params["w"].shape[1]) if has_pre else Cin
    R, Lin, Lout = N * H, W * Cin, W * Cout

    # NCHW -> NHWC -> lane-dense (N*H, W*C).  (Unmasked lane stores need Lout % 128 == 0;
    # other shapes still run, just with masked vst.)
    x2d = jnp.transpose(x_nchw, (0, 2, 3, 1)).reshape(R, Lin).astype(jnp.float32)

    nb = block_images if block_images is not None else _pick_block_images(N, H, max(Lin, Lout))
    if N % nb or ((nb * H) % 8 and nb * H != R):
        nb = N                                    # fall back to one full-array block
    rows = nb * H
    n_blocks = N // nb

    # Tiny per-row / per-lane coordinate vectors (replace full-tile iotas + % / //).
    h_pos = jnp.asarray((np.arange(rows) % H).astype(np.float32).reshape(rows, 1))
    w_pos = jnp.asarray((np.arange(Lout) // Cout).astype(np.float32).reshape(1, Lout))

    cparams = pltpu.CompilerParams(
        dimension_semantics=("parallel",) if not has_pre else ("arbitrary", "arbitrary"),
        vmem_limit_bytes=32 * 1024 * 1024)

    if not has_pre:
        out2d = pl.pallas_call(
            functools.partial(_pool_only_kernel, C=Cout, mode=mode),
            out_shape=jax.ShapeDtypeStruct((R, Lout), jnp.float32),
            grid=(n_blocks,),
            in_specs=[pl.BlockSpec((rows, 1), lambda i: (0, 0)),
                      pl.BlockSpec((1, Lout), lambda i: (0, 0)),
                      pl.BlockSpec((rows, Lout), lambda i: (i, 0))],
            out_specs=pl.BlockSpec((rows, Lout), lambda i: (i, 0)),
            compiler_params=cparams,
        )(h_pos, w_pos, x2d)
    else:
        # Block-diagonal 1x1-conv weight; cast to bf16 via conv_dtype on v6e/v7x MXU.
        wbd = jnp.kron(jnp.eye(W, dtype=jnp.float32),
                       params["w"].astype(jnp.float32)).astype(conv_dtype)
        # Per-lane gamma/beta (channel-minor replication) replace sel/selt matmuls.
        gamma_l = jnp.tile(params["gamma"].astype(jnp.float32), W).reshape(1, Lout)
        beta_l = jnp.tile(params["beta"].astype(jnp.float32), W).reshape(1, Lout)

        out2d = pl.pallas_call(
            functools.partial(_pre_pool_kernel, W=W, Cout=Cout, mode=mode,
                              inv_count=1.0 / float(N * H * W)),
            out_shape=jax.ShapeDtypeStruct((R, Lout), jnp.float32),
            grid=(2, n_blocks),             # phase axis first: 0 = stats, 1 = apply
            in_specs=[pl.BlockSpec((rows, 1), lambda p, i: (0, 0)),
                      pl.BlockSpec((1, Lout), lambda p, i: (0, 0)),
                      pl.BlockSpec((rows, Lin), lambda p, i: (i, 0)),
                      pl.BlockSpec((Lin, Lout), lambda p, i: (0, 0)),
                      pl.BlockSpec((1, Lout), lambda p, i: (0, 0)),
                      pl.BlockSpec((1, Lout), lambda p, i: (0, 0))],
            out_specs=pl.BlockSpec((rows, Lout), lambda p, i: (i, 0)),
            scratch_shapes=[pltpu.VMEM((1, Lout), jnp.float32),
                            pltpu.VMEM((1, Lout), jnp.float32)],
            compiler_params=cparams,
        )(h_pos, w_pos, x2d, wbd, gamma_l, beta_l)

    return jnp.transpose(out2d.reshape(N, H, W, Cout), (0, 3, 1, 2))


# ---------------------------------------------------------------------------
# Parameters (synthetic, deterministic) and pure-JAX reference
# ---------------------------------------------------------------------------
def init_preprocess_params(key, C_in, C_out):
    k1, k2, k3 = jax.random.split(key, 3)
    # PyTorch Conv2d weight layout (C_out, C_in, 1, 1); bias disabled (affine BN).
    w_t = 0.1 * jax.random.normal(k1, (C_out, C_in, 1, 1), jnp.float32)
    w = jnp.transpose(w_t[:, :, 0, 0], (1, 0))            # (C_in, C_out)
    gamma = 1.0 + 0.1 * jax.random.normal(k2, (C_out,), jnp.float32)
    beta = 0.1 * jax.random.normal(k3, (C_out,), jnp.float32)
    return dict(w=w, gamma=gamma, beta=beta)


def _ref_pooling(x_nchw, params, mode):
    x = jnp.transpose(x_nchw, (0, 2, 3, 1))
    if params is not None:
        y = jnp.einsum("nhwc,cd->nhwd", jnp.maximum(x, 0.0), params["w"])
        mean = jnp.mean(y, axis=(0, 1, 2), keepdims=True)
        var = jnp.mean(jnp.square(y - mean), axis=(0, 1, 2), keepdims=True)
        x = (y - mean) * jax.lax.rsqrt(var + BN_EPS) * params["gamma"] + params["beta"]
    pads = [(0, 0), (1, 1), (1, 1), (0, 0)]
    if mode == "avg":
        s = jax.lax.reduce_window(x, 0.0, jax.lax.add, (1, 3, 3, 1), (1, 1, 1, 1), pads)
        c = jax.lax.reduce_window(jnp.ones_like(x), 0.0, jax.lax.add,
                                  (1, 3, 3, 1), (1, 1, 1, 1), pads)
        out = s / c
    else:
        out = jax.lax.reduce_window(x, -jnp.inf, jax.lax.max,
                                    (1, 3, 3, 1), (1, 1, 1, 1), pads)
    return jnp.transpose(out, (0, 3, 1, 2))


# ---------------------------------------------------------------------------
if __name__ == "__main__":
    key = jax.random.PRNGKey(0)
    kx1, kx2, kp = jax.random.split(key, 3)

    N, Cin, Cout, H, W = 2, 4, 8, 16, 16

    # C_in != C_out -> ReLUConvBN(1x1) preprocess before the pool.
    x_pre = jax.random.normal(kx1, (N, Cin, H, W), jnp.float32)     # NCHW like PyTorch
    params = init_preprocess_params(kp, Cin, Cout)
    # C_in == C_out -> identity before the pool.
    x_id = jax.random.normal(kx2, (N, Cout, H, W), jnp.float32)

    # block_images=1 -> multi-block grid even at this tiny size (exercises tiling,
    # the two-phase BN accumulation and the output revisit pattern).
    checks = [("avg+preprocess", x_pre, params, "avg"),
              ("max+preprocess", x_pre, params, "max"),
              ("avg+identity", x_id, None, "avg"),
              ("max+identity", x_id, None, "max")]
    for name, x, p, mode in checks:
        fwd = jax.jit(functools.partial(pooling_forward, mode=mode, block_images=1))
        out = jax.block_until_ready(fwd(x, p))
        ref = jax.block_until_ready(_ref_pooling(x, p, mode))
        assert out.shape == ref.shape, name
        assert jnp.allclose(out, ref, atol=1e-2, rtol=1e-2), f"{name} mismatch"

    print("KERNEL_OK")
</pallas_src>

<mosaic_0001>
module attributes {stable_mosaic.version = 11 : i64} {
  func.func @_pre_pool_kernel(%arg0: i32, %arg1: i32, %arg2: memref<16x1xf32, #tpu.memory_space<vmem>>, %arg3: memref<1x128xf32, #tpu.memory_space<vmem>>, %arg4: memref<16x64xf32, #tpu.memory_space<vmem>>, %arg5: memref<64x128xf32, #tpu.memory_space<vmem>>, %arg6: memref<1x128xf32, #tpu.memory_space<vmem>>, %arg7: memref<1x128xf32, #tpu.memory_space<vmem>>, %arg8: memref<16x128xf32, #tpu.memory_space<vmem>>, %arg9: memref<1x128xf32, #tpu.memory_space<vmem>>, %arg10: memref<1x128xf32, #tpu.memory_space<vmem>>) attributes {dimension_semantics = [#tpu.dimension_semantics<arbitrary>, #tpu.dimension_semantics<arbitrary>], iteration_bounds = array<i64: 2, 2>, scalar_prefetch = 0 : i64, scratch_operands = 2 : i64, tpu.core_type = #tpu.core_type<tc>, window_params = [{pipeline_mode = #tpu.pipeline_mode<synchronous>, transform_indices = @transform_0, window_bounds = array<i64: 16, 1>}, {pipeline_mode = #tpu.pipeline_mode<synchronous>, transform_indices = @transform_1, window_bounds = array<i64: 1, 128>}, {transform_indices = @transform_2, window_bounds = array<i64: 16, 64>}, {pipeline_mode = #tpu.pipeline_mode<synchronous>, transform_indices = @transform_3, window_bounds = array<i64: 64, 128>}, {pipeline_mode = #tpu.pipeline_mode<synchronous>, transform_indices = @transform_4, window_bounds = array<i64: 1, 128>}, {pipeline_mode = #tpu.pipeline_mode<synchronous>, transform_indices = @transform_5, window_bounds = array<i64: 1, 128>}, {transform_indices = @transform_6, window_bounds = array<i64: 16, 128>}]} {
    %c0 = arith.constant 0 : index
    %c0_0 = arith.constant 0 : index
    %0 = vector.load %arg4[%c0, %c0_0] : memref<16x64xf32, #tpu.memory_space<vmem>>, vector<16x64xf32>
    %cst = arith.constant 0.000000e+00 : f32
    %1 = vector.broadcast %cst : f32 to vector<16x64xf32>
    %2 = arith.maximumf %0, %1 : vector<16x64xf32>
    %c0_1 = arith.constant 0 : index
    %c0_2 = arith.constant 0 : index
    %3 = vector.load %arg5[%c0_1, %c0_2] : memref<64x128xf32, #tpu.memory_space<vmem>>, vector<64x128xf32>
    %cst_3 = arith.constant dense<0.000000e+00> : vector<16x128xf32>
    %4 = tpu.matmul %2, %3, %cst_3 {dimension_numbers = #tpu.dot_dimension_numbers<[1], [0], [0], [1], [0, 0, 1, 1], [], []>} : vector<16x64xf32>, vector<64x128xf32>, vector<16x128xf32> -> vector<16x128xf32>
    %c0_i32 = arith.constant 0 : i32
    %5 = arith.cmpi eq, %arg0, %c0_i32 : i32
    %c0_i32_4 = arith.constant 0 : i32
    %6 = arith.cmpi eq, %arg1, %c0_i32_4 : i32
    %7 = arith.andi %5, %6 : i1
    %8 = arith.extui %7 : i1 to i32
    %c0_i32_5 = arith.constant 0 : i32
    %9 = arith.cmpi ne, %8, %c0_i32_5 : i32
    scf.if %9 {
      %cst_9 = arith.constant 0.000000e+00 : f32
      %16 = vector.broadcast %cst_9 : f32 to vector<1x128xf32>
      %c0_10 = arith.constant 0 : index
      %c0_11 = arith.constant 0 : index
      %17 = vector.load %arg9[%c0_10, %c0_11] : memref<1x128xf32, #tpu.memory_space<vmem>>, vector<1x128xf32>
      tpu.vector_store %arg9[%c0_10, %c0_11], %16 {strides = array<i32>} : memref<1x128xf32, #tpu.memory_space<vmem>>, vector<1x128xf32>,
      %cst_12 = arith.constant 0.000000e+00 : f32
      %18 = vector.broadcast %cst_12 : f32 to vector<1x128xf32>
      %c0_13 = arith.constant 0 : index
      %c0_14 = arith.constant 0 : index
      %19 = vector.load %arg10[%c0_13, %c0_14] : memref<1x128xf32, #tpu.memory_space<vmem>>, vector<1x128xf32>
      tpu.vector_store %arg10[%c0_13, %c0_14], %18 {strides = array<i32>} : memref<1x128xf32, #tpu.memory_space<vmem>>, vector<1x128xf32>,
    } else {
    }
    %c0_i32_6 = arith.constant 0 : i32
    %10 = arith.cmpi eq, %arg0, %c0_i32_6 : i32
    %11 = arith.extui %10 : i1 to i32
    %c0_i32_7 = arith.constant 0 : i32
    %12 = arith.cmpi ne, %11, %c0_i32_7 : i32
    scf.if %12 {
      %c0_9 = arith.constant 0 : index
      %c0_10 = arith.constant 0 : index
      %16 = vector.load %arg9[%c0_9, %c0_10] : memref<1x128xf32, #tpu.memory_space<vmem>>, vector<1x128xf32>
      %cst_11 = arith.constant dense<0.000000e+00> : vector<128xf32>
      %17 = vector.multi_reduction <add>, %4, %cst_11 [0] : vector<16x128xf32> to vector<128xf32>
      %18 = vector.shape_cast %17 : vector<128xf32> to vector<1x128xf32>
      %19 = arith.addf %16, %18 : vector<1x128xf32>
      %c0_12 = arith.constant 0 : index
      %c0_13 = arith.constant 0 : index
      %20 = vector.load %arg9[%c0_12, %c0_13] : memref<1x128xf32, #tpu.memory_space<vmem>>, vector<1x128xf32>
      tpu.vector_store %arg9[%c0_12, %c0_13], %19 {strides = array<i32>} : memref<1x128xf32, #tpu.memory_space<vmem>>, vector<1x128xf32>,
      %c0_14 = arith.constant 0 : index
      %c0_15 = arith.constant 0 : index
      %21 = vector.load %arg10[%c0_14, %c0_15] : memref<1x128xf32, #tpu.memory_space<vmem>>, vector<1x128xf32>
      %22 = arith.mulf %4, %4 : vector<16x128xf32>
      %cst_16 = arith.constant dense<0.000000e+00> : vector<128xf32>
      %23 = vector.multi_reduction <add>, %22, %cst_16 [0] : vector<16x128xf32> to vector<128xf32>
      %24 = vector.shape_cast %23 : vector<128xf32> to vector<1x128xf32>
      %25 = arith.addf %21, %24 : vector<1x128xf32>
      %c0_17 = arith.constant 0 : index
      %c0_18 = arith.constant 0 : index
      %26 = vector.load %arg10[%c0_17, %c0_18] : memref<1x128xf32, #tpu.memory_space<vmem>>, vector<1x128xf32>
      tpu.vector_store %arg10[%c0_17, %c0_18], %25 {strides = array<i32>} : memref<1x128xf32, #tpu.memory_space<vmem>>, vector<1x128xf32>,
    } else {
    }
    %c1_i32 = arith.constant 1 : i32
    %13 = arith.cmpi eq, %arg0, %c1_i32 : i32
    %14 = arith.extui %13 : i1 to i32
    %c0_i32_8 = arith.constant 0 : i32
    %15 = arith.cmpi ne, %14, %c0_i32_8 : i32
    scf.if %15 {
      %c0_9 = arith.constant 0 : index
      %c0_10 = arith.constant 0 : index
      %16 = vector.load %arg9[%c0_9, %c0_10] : memref<1x128xf32, #tpu.memory_space<vmem>>, vector<1x128xf32>
      %c8_i32 = arith.constant 8 : i32
      %17 = tpu.dynamic_rotate %16 by %c8_i32 dim 1 : vector<1x128xf32>, i32 -> vector<1x128xf32>
      %18 = arith.addf %16, %17 : vector<1x128xf32>
      %c16_i32 = arith.constant 16 : i32
      %19 = tpu.dynamic_rotate %18 by %c16_i32 dim 1 : vector<1x128xf32>, i32 -> vector<1x128xf32>
      %20 = arith.addf %18, %19 : vector<1x128xf32>
      %c32_i32 = arith.constant 32 : i32
      %21 = tpu.dynamic_rotate %20 by %c32_i32 dim 1 : vector<1x128xf32>, i32 -> vector<1x128xf32>
      %22 = arith.addf %20, %21 : vector<1x128xf32>
      %c64_i32 = arith.constant 64 : i32
      %23 = tpu.dynamic_rotate %22 by %c64_i32 dim 1 : vector<1x128xf32>, i32 -> vector<1x128xf32>
      %24 = arith.addf %22, %23 : vector<1x128xf32>
      %c0_11 = arith.constant 0 : index
      %c0_12 = arith.constant 0 : index
      %25 = vector.load %arg10[%c0_11, %c0_12] : memref<1x128xf32, #tpu.memory_space<vmem>>, vector<1x128xf32>
      %c8_i32_13 = arith.constant 8 : i32
      %26 = tpu.dynamic_rotate %25 by %c8_i32_13 dim 1 : vector<1x128xf32>, i32 -> vector<1x128xf32>
      %27 = arith.addf %25, %26 : vector<1x128xf32>
      %c16_i32_14 = arith.constant 16 : i32
      %28 = tpu.dynamic_rotate %27 by %c16_i32_14 dim 1 : vector<1x128xf32>, i32 -> vector<1x128xf32>
      %29 = arith.addf %27, %28 : vector<1x128xf32>
      %c32_i32_15 = arith.constant 32 : i32
      %30 = tpu.dynamic_rotate %29 by %c32_i32_15 dim 1 : vector<1x128xf32>, i32 -> vector<1x128xf32>
      %31 = arith.addf %29, %30 : vector<1x128xf32>
      %c64_i32_16 = arith.constant 64 : i32
      %32 = tpu.dynamic_rotate %31 by %c64_i32_16 dim 1 : vector<1x128xf32>, i32 -> vector<1x128xf32>
      %33 = arith.addf %31, %32 : vector<1x128xf32>
      %cst_17 = arith.constant 0.001953125 : f32
      %34 = vector.broadcast %cst_17 : f32 to vector<1x128xf32>
      %35 = arith.mulf %24, %34 : vector<1x128xf32>
      %cst_18 = arith.constant 0.001953125 : f32
      %36 = vector.broadcast %cst_18 : f32 to vector<1x128xf32>
      %37 = arith.mulf %33, %36 : vector<1x128xf32>
      %38 = arith.mulf %35, %35 : vector<1x128xf32>
      %39 = arith.subf %37, %38 : vector<1x128xf32>
      %cst_19 = arith.constant 0.000000e+00 : f32
      %40 = vector.broadcast %cst_19 : f32 to vector<1x128xf32>
      %41 = arith.maximumf %39, %40 : vector<1x128xf32>
      %c0_20 = arith.constant 0 : index
      %c0_21 = arith.constant 0 : index
      %42 = vector.load %arg6[%c0_20, %c0_21] : memref<1x128xf32, #tpu.memory_space<vmem>>, vector<1x128xf32>
      %cst_22 = arith.constant 9.99999974E-6 : f32
      %43 = vector.broadcast %cst_22 : f32 to vector<1x128xf32>
      %44 = arith.addf %41, %43 : vector<1x128xf32>
      %45 = math.rsqrt %44 : vector<1x128xf32>
      %46 = arith.mulf %42, %45 : vector<1x128xf32>
      %c0_23 = arith.constant 0 : index
      %c0_24 = arith.constant 0 : index
      %47 = vector.load %arg7[%c0_23, %c0_24] : memref<1x128xf32, #tpu.memory_space<vmem>>, vector<1x128xf32>
      %48 = arith.mulf %35, %46 : vector<1x128xf32>
      %49 = arith.subf %47, %48 : vector<1x128xf32>
      %50 = vector.broadcast %46 : vector<1x128xf32> to vector<16x128xf32>
      %51 = arith.mulf %4, %50 : vector<16x128xf32>
      %52 = vector.broadcast %49 : vector<1x128xf32> to vector<16x128xf32>
      %53 = arith.addf %51, %52 : vector<16x128xf32>
      %c0_25 = arith.constant 0 : index
      %c0_26 = arith.constant 0 : index
      %54 = vector.load %arg2[%c0_25, %c0_26] : memref<16x1xf32, #tpu.memory_space<vmem>>, vector<16x1xf32>
      %c0_27 = arith.constant 0 : index
      %c0_28 = arith.constant 0 : index
      %55 = vector.load %arg3[%c0_27, %c0_28] : memref<1x128xf32, #tpu.memory_space<vmem>>, vector<1x128xf32>
      %cst_29 = arith.constant 1.000000e+00 : f32
      %56 = vector.broadcast %cst_29 : f32 to vector<1x128xf32>
      %c8_i32_30 = arith.constant 8 : i32
      %57 = tpu.dynamic_rotate %53 by %c8_i32_30 dim 1 : vector<16x128xf32>, i32 -> vector<16x128xf32>
      %c8_i32_31 = arith.constant 8 : i32
      %58 = tpu.dynamic_rotate %55 by %c8_i32_31 dim 1 : vector<1x128xf32>, i32 -> vector<1x128xf32>
      %59 = arith.subf %58, %55 : vector<1x128xf32>
      %60 = math.absf %59 : vector<1x128xf32>
      %cst_32 = arith.constant 1.000000e+00 : f32
      %61 = vector.broadcast %cst_32 : f32 to vector<1x128xf32>
      %62 = arith.cmpf oeq, %60, %61 : vector<1x128xf32>
      %cst_33 = arith.constant 0.000000e+00 : f32
      %63 = vector.shape_cast %62 : vector<1x128xi1> to vector<1x128xi1>
      %64 = vector.broadcast %63 : vector<1x128xi1> to vector<16x128xi1>
      %65 = vector.broadcast %cst_33 : f32 to vector<16x128xf32>
      %66 = arith.select %64, %57, %65 : vector<16x128xi1>, vector<16x128xf32>
      %67 = arith.addf %53, %66 : vector<16x128xf32>
      %68 = arith.extui %62 : vector<1x128xi1> to vector<1x128xi32>
      %69 = arith.sitofp %68 : vector<1x128xi32> to vector<1x128xf32>
      %70 = arith.addf %56, %69 : vector<1x128xf32>
      %c120_i32 = arith.constant 120 : i32
      %71 = tpu.dynamic_rotate %53 by %c120_i32 dim 1 : vector<16x128xf32>, i32 -> vector<16x128xf32>
      %c120_i32_34 = arith.constant 120 : i32
      %72 = tpu.dynamic_rotate %55 by %c120_i32_34 dim 1 : vector<1x128xf32>, i32 -> vector<1x128xf32>
      %73 = arith.subf %72, %55 : vector<1x128xf32>
      %74 = math.absf %73 : vector<1x128xf32>
      %cst_35 = arith.constant 1.000000e+00 : f32
      %75 = vector.broadcast %cst_35 : f32 to vector<1x128xf32>
      %76 = arith.cmpf oeq, %74, %75 : vector<1x128xf32>
      %cst_36 = arith.constant 0.000000e+00 : f32
      %77 = vector.shape_cast %76 : vector<1x128xi1> to vector<1x128xi1>
      %78 = vector.broadcast %77 : vector<1x128xi1> to vector<16x128xi1>
      %79 = vector.broadcast %cst_36 : f32 to vector<16x128xf32>
      %80 = arith.select %78, %71, %79 : vector<16x128xi1>, vector<16x128xf32>
      %81 = arith.addf %67, %80 : vector<16x128xf32>
      %82 = arith.extui %76 : vector<1x128xi1> to vector<1x128xi32>
      %83 = arith.sitofp %82 : vector<1x128xi32> to vector<1x128xf32>
      %84 = arith.addf %70, %83 : vector<1x128xf32>
      %cst_37 = arith.constant 1.000000e+00 : f32
      %85 = vector.broadcast %cst_37 : f32 to vector<16x1xf32>
      %c1_i32_38 = arith.constant 1 : i32
      %86 = tpu.dynamic_rotate %81 by %c1_i32_38 dim 0 : vector<16x128xf32>, i32 -> vector<16x128xf32>
      %c1_i32_39 = arith.constant 1 : i32
      %87 = tpu.dynamic_rotate %54 by %c1_i32_39 dim 0 : vector<16x1xf32>, i32 -> vector<16x1xf32>
      %88 = arith.subf %87, %54 : vector<16x1xf32>
      %89 = math.absf %88 : vector<16x1xf32>
      %cst_40 = arith.constant 1.000000e+00 : f32
      %90 = vector.broadcast %cst_40 : f32 to vector<16x1xf32>
      %91 = arith.cmpf oeq, %89, %90 : vector<16x1xf32>
      %cst_41 = arith.constant 0.000000e+00 : f32
      %92 = vector.shape_cast %91 : vector<16x1xi1> to vector<16x1xi1>
      %93 = vector.broadcast %92 : vector<16x1xi1> to vector<16x128xi1>
      %94 = vector.broadcast %cst_41 : f32 to vector<16x128xf32>
      %95 = arith.select %93, %86, %94 : vector<16x128xi1>, vector<16x128xf32>
      %96 = arith.addf %81, %95 : vector<16x128xf32>
      %97 = arith.extui %91 : vector<16x1xi1> to vector<16x1xi32>
      %98 = arith.sitofp %97 : vector<16x1xi32> to vector<16x1xf32>
      %99 = arith.addf %85, %98 : vector<16x1xf32>
      %c15_i32 = arith.constant 15 : i32
      %100 = tpu.dynamic_rotate %81 by %c15_i32 dim 0 : vector<16x128xf32>, i32 -> vector<16x128xf32>
      %c15_i32_42 = arith.constant 15 : i32
      %101 = tpu.dynamic_rotate %54 by %c15_i32_42 dim 0 : vector<16x1xf32>, i32 -> vector<16x1xf32>
      %102 = arith.subf %101, %54 : vector<16x1xf32>
      %103 = math.absf %102 : vector<16x1xf32>
      %cst_43 = arith.constant 1.000000e+00 : f32
      %104 = vector.broadcast %cst_43 : f32 to vector<16x1xf32>
      %105 = arith.cmpf oeq, %103, %104 : vector<16x1xf32>
      %cst_44 = arith.constant 0.000000e+00 : f32
      %106 = vector.shape_cast %105 : vector<16x1xi1> to vector<16x1xi1>
      %107 = vector.broadcast %106 : vector<16x1xi1> to vector<16x128xi1>
      %108 = vector.broadcast %cst_44 : f32 to vector<16x128xf32>
      %109 = arith.select %107, %100, %108 : vector<16x128xi1>, vector<16x128xf32>
      %110 = arith.addf %96, %109 : vector<16x128xf32>
      %111 = arith.extui %105 : vector<16x1xi1> to vector<16x1xi32>
      %112 = arith.sitofp %111 : vector<16x1xi32> to vector<16x1xf32>
      %113 = arith.addf %99, %112 : vector<16x1xf32>
      %cst_45 = arith.constant 1.000000e+00 : f32
      %114 = vector.broadcast %cst_45 : f32 to vector<1x128xf32>
      %115 = arith.divf %114, %84 : vector<1x128xf32>
      %116 = vector.broadcast %115 : vector<1x128xf32> to vector<16x128xf32>
      %117 = arith.mulf %110, %116 : vector<16x128xf32>
      %cst_46 = arith.constant 1.000000e+00 : f32
      %118 = vector.broadcast %cst_46 : f32 to vector<16x1xf32>
      %119 = arith.divf %118, %113 : vector<16x1xf32>
      %120 = vector.broadcast %119 : vector<16x1xf32> to vector<16x128xf32>
      %121 = arith.mulf %117, %120 : vector<16x128xf32>
      %c0_47 = arith.constant 0 : index
      %c0_48 = arith.constant 0 : index
      %122 = vector.load %arg8[%c0_47, %c0_48] : memref<16x128xf32, #tpu.memory_space<vmem>>, vector<16x128xf32>
      tpu.vector_store %arg8[%c0_47, %c0_48], %121 {strides = array<i32>} : memref<16x128xf32, #tpu.memory_space<vmem>>, vector<16x128xf32>,
    } else {
    }
    return
  }
  func.func @transform_0(%arg0: i32, %arg1: i32) -> (i32, i32) {
    %c0_i32 = arith.constant 0 : i32
    %c0_i32_0 = arith.constant 0 : i32
    %c0_i32_1 = arith.constant 0 : i32
    return %c0_i32, %c0_i32_0 : i32, i32
  }
  func.func @transform_1(%arg0: i32, %arg1: i32) -> (i32, i32) {
    %c0_i32 = arith.constant 0 : i32
    %c0_i32_0 = arith.constant 0 : i32
    %c0_i32_1 = arith.constant 0 : i32
    return %c0_i32, %c0_i32_0 : i32, i32
  }
  func.func @transform_2(%arg0: i32, %arg1: i32) -> (i32, i32) {
    %c0_i32 = arith.constant 0 : i32
    %c0_i32_0 = arith.constant 0 : i32
    return %arg1, %c0_i32 : i32, i32
  }
  func.func @transform_3(%arg0: i32, %arg1: i32) -> (i32, i32) {
    %c0_i32 = arith.constant 0 : i32
    %c0_i32_0 = arith.constant 0 : i32
    %c0_i32_1 = arith.constant 0 : i32
    return %c0_i32, %c0_i32_0 : i32, i32
  }
  func.func @transform_4(%arg0: i32, %arg1: i32) -> (i32, i32) {
    %c0_i32 = arith.constant 0 : i32
    %c0_i32_0 = arith.constant 0 : i32
    %c0_i32_1 = arith.constant 0 : i32
    return %c0_i32, %c0_i32_0 : i32, i32
  }
  func.func @transform_5(%arg0: i32, %arg1: i32) -> (i32, i32) {
    %c0_i32 = arith.constant 0 : i32
    %c0_i32_0 = arith.constant 0 : i32
    %c0_i32_1 = arith.constant 0 : i32
    return %c0_i32, %c0_i32_0 : i32, i32
  }
  func.func @transform_6(%arg0: i32, %arg1: i32) -> (i32, i32) {
    %c0_i32 = arith.constant 0 : i32
    %c0_i32_0 = arith.constant 0 : i32
    return %arg1, %c0_i32 : i32, i32
  }
}

</mosaic_0001>

<llo_original>
// kernel: tile.14
$region0: #{tile.14}
  %s0 = inlined_call_operand.vmem [shape: f32[16,8], index: 0, kind: input, shape index: {}]
  %s1 = inlined_call_operand.vmem [shape: f32[1,128], index: 1, kind: output, shape index: {}]
  $region1: #{tile.14} parent=0
    #allocation0 [shape = 'u8[4096]{0}', space=vmem, size = 0x1000, scoped, tag = 'scoped mem for output reshape']
    %v2 = vld [vmem:[%s0] sm:$0x1]
    %vm3 = vcmask 64512
    %4 = vst.msk [vmem:[#allocation0] sm:$0x1] %vm3, %v2
    %s5 = scalar_lea.vmem %s0, 15
    %v6 = vld [vmem:[%s5] sm:$0x1]
    %7 = vrot.lane.b32.xlu0 %v6, 120
    %v8 = vpop.permute.xlu0 %7
    %vm9 = vcmask 1048512
    %10 = vst.msk [vmem:[#allocation0] sm:$0x1] %vm9, %v8
    %s11 = scalar_lea.vmem %s0, 14
    %v12 = vld [vmem:[%s11] sm:$0x1]
    %13 = vrot.lane.b32.xlu0 %v12, 112
    %v14 = vpop.permute.xlu0 %13
    %vm15 = vcmask 982912
    %16 = vst.msk [vmem:[#allocation0] sm:$0x1] %vm15, %v14
    %s17 = scalar_lea.vmem %s0, 13
    %v18 = vld [vmem:[%s17] sm:$0x1]
    %19 = vrot.lane.b32.xlu0 %v18, 104
    %v20 = vpop.permute.xlu0 %19
    %vm21 = vcmask 917312
    %22 = vst.msk [vmem:[#allocation0] sm:$0x1] %vm21, %v20
    %s23 = scalar_lea.vmem %s0, 12
    %v24 = vld [vmem:[%s23] sm:$0x1]
    %25 = vrot.lane.b32.xlu0 %v24, 96
    %v26 = vpop.permute.xlu0 %25
    %vm27 = vcmask 851712
    %28 = vst.msk [vmem:[#allocation0] sm:$0x1] %vm27, %v26
    %s29 = scalar_lea.vmem %s0, 11
    %v30 = vld [vmem:[%s29] sm:$0x1]
    %31 = vrot.lane.b32.xlu0 %v30, 88
    %v32 = vpop.permute.xlu0 %31
    %vm33 = vcmask 786112
    %34 = vst.msk [vmem:[#allocation0] sm:$0x1] %vm33, %v32
    %s35 = scalar_lea.vmem %s0, 10
    %v36 = vld [vmem:[%s35] sm:$0x1]
    %37 = vrot.lane.b32.xlu0 %v36, 80
    %v38 = vpop.permute.xlu0 %37
    %vm39 = vcmask 720512
    %40 = vst.msk [vmem:[#allocation0] sm:$0x1] %vm39, %v38
    %s41 = scalar_lea.vmem %s0, 9
    %v42 = vld [vmem:[%s41] sm:$0x1]
    %43 = vrot.lane.b32.xlu0 %v42, 72
    %v44 = vpop.permute.xlu0 %43
    %vm45 = vcmask 654912
    %46 = vst.msk [vmem:[#allocation0] sm:$0x1] %vm45, %v44
    %s47 = scalar_lea.vmem %s0, 8
    %v48 = vld [vmem:[%s47] sm:$0x1]
    %49 = vrot.lane.b32.xlu0 %v48, 64
    %v50 = vpop.permute.xlu0 %49
    %vm51 = vcmask 589312
    %52 = vst.msk [vmem:[#allocation0] sm:$0x1] %vm51, %v50
    %s53 = scalar_lea.vmem %s0, 7
    %v54 = vld [vmem:[%s53] sm:$0x1]
    %55 = vrot.lane.b32.xlu0 %v54, 56
    %v56 = vpop.permute.xlu0 %55
    %vm57 = vcmask 523712
    %58 = vst.msk [vmem:[#allocation0] sm:$0x1] %vm57, %v56
    %s59 = scalar_lea.vmem %s0, 6
    %v60 = vld [vmem:[%s59] sm:$0x1]
    %61 = vrot.lane.b32.xlu0 %v60, 48
    %v62 = vpop.permute.xlu0 %61
    %vm63 = vcmask 458112
    %64 = vst.msk [vmem:[#allocation0] sm:$0x1] %vm63, %v62
    %s65 = scalar_lea.vmem %s0, 5
    %v66 = vld [vmem:[%s65] sm:$0x1]
    %67 = vrot.lane.b32.xlu0 %v66, 40
    %v68 = vpop.permute.xlu0 %67
    %vm69 = vcmask 392512
    %70 = vst.msk [vmem:[#allocation0] sm:$0x1] %vm69, %v68
    %s71 = scalar_lea.vmem %s0, 4
    %v72 = vld [vmem:[%s71] sm:$0x1]
    %73 = vrot.lane.b32.xlu0 %v72, 32
    %v74 = vpop.permute.xlu0 %73
    %vm75 = vcmask 326912
    %76 = vst.msk [vmem:[#allocation0] sm:$0x1] %vm75, %v74
    %s77 = scalar_lea.vmem %s0, 3
    %v78 = vld [vmem:[%s77] sm:$0x1]
    %79 = vrot.lane.b32.xlu0 %v78, 24
    %v80 = vpop.permute.xlu0 %79
    %vm81 = vcmask 261312
    %82 = vst.msk [vmem:[#allocation0] sm:$0x1] %vm81, %v80
    %s83 = scalar_lea.vmem %s0, 2
    %v84 = vld [vmem:[%s83] sm:$0x1]
    %85 = vrot.lane.b32.xlu0 %v84, 16
    %v86 = vpop.permute.xlu0 %85
    %vm87 = vcmask 195712
    %88 = vst.msk [vmem:[#allocation0] sm:$0x1] %vm87, %v86
    %s89 = scalar_lea.vmem %s0, 1
    %v90 = vld [vmem:[%s89] sm:$0x1]
    %91 = vrot.lane.b32.xlu0 %v90, 8
    %v92 = vpop.permute.xlu0 %91
    %vm93 = vcmask 130112
    %94 = vst.msk [vmem:[#allocation0] sm:$0x1] %vm93, %v92
    %s96 = sshllo.u32 0, 1
    %v98 = vld [vmem:[#allocation0] sm:%s96]
    %s99 = sshllo.u32 0, 1
    %100 = vst [vmem:[%s1] sm:%s99] %v98

// kernel: tile.13
$region0: #{tile.13}
  #allocation0 [shape = 's32[1]{0}', space=sflag, size = 0x4, scoped, tag = 'scoped memory for tile.13']
  %s0 = inlined_call_operand.vmem [shape: f32[8], index: 0, kind: input, shape index: {}]
  %s1 = inlined_call_operand.vmem [shape: f32[16,8], index: 1, kind: output, shape index: {}]
  // Predicated region
  $region2: #{tile.13} parent=0 // pred_check
    _
  $region3: #{tile.13} parent=0 // pred_check_branch
    %3 = sbr.rel (0) target = $region5
  $region4: #{tile.13} parent=0 // pred_region
    _
  $region5: #{tile.13} parent=0 // pred_fallthru
    _
  %v4 = vld [vmem:[%s0] ss:$0 sm:$0xff]
  %5 = vst [vmem:[%s1] sm:$0xff] %v4
  %s6 = scalar_lea.vmem %s1, 8
  %7 = vst [vmem:[%s6] sm:$0xff] %v4

// kernel: pooling_forward.1
$region0: #{pooling_forward.1}
  #allocation0 [shape = 'u32[]', space=smem, size = 0x4, offset = 0x4, fixed_abs, tag = 'smem constant byte address 0x4 - core index']
  #allocation1 [shape = 'u32[144,128]{1,0:T(1,128)}', space=vmem, size = 0x12000, scoped, tag = 'internal scratch']
  #allocation2 [shape = 'f32[1,128]{1,0:T(1,128)}', space=vmem, size = 0x200, scoped, tag = 'scratch operand']
  #allocation3 [shape = 'f32[1,128]{1,0:T(1,128)}', space=vmem, size = 0x200, scoped, tag = 'scratch operand']
  %s0 = inlined_call_operand.vmem [shape: f32[16,1], index: 0, kind: input, shape index: {}]
  %s1 = inlined_call_operand.vmem [shape: f32[1,128], index: 1, kind: input, shape index: {}]
  %s2 = inlined_call_operand.vmem [shape: f32[32,64], index: 2, kind: input, shape index: {}]
  %s3 = inlined_call_operand.vmem [shape: f32[64,128], index: 3, kind: input, shape index: {}]
  %s4 = inlined_call_operand.vmem [shape: f32[1,128], index: 4, kind: input, shape index: {}]
  %s5 = inlined_call_operand.vmem [shape: f32[1,128], index: 5, kind: input, shape index: {}]
  %s6 = inlined_call_operand.vmem [shape: f32[32,128], index: 6, kind: output, shape index: {}]
  %s7 = sld [smem:[#allocation0]]
  $region69: #{pooling_forward.1} parent=0
    _
  %s9 = ssub.s32 1, %s7
  %s10 = scalar_select 0, %s9, %s7
  loop: start=0, step=1, limit=6
  $region2: #{pooling_forward.1} parent=0 // loop_pre_header
    _
  $region3: #{pooling_forward.1} parent=0 // loop_header
    %s12 = sphi 0, %s16
    %p13 = scmp.ge.s32.totalorder %s12, 6
    %s19 = sphi 0, %s31
    %s20 = sphi 0, %s27
    %s21 = sphi 0, %s19
    %s22 = sphi 0, %s20
    %s23 = sphi 0, %s21
    %s24 = sphi 0, %s22
    %s32 = sphi 0, %s32
    %s34 = sphi 0, %s32
    %s35 = sphi 0, %s34
    %s49 = sphi 0, %s35
    %s53 = sphi 0, %s53
    %s55 = sphi 0, %s53
    %s56 = sphi 0, %s55
    %s70 = sphi 0, %s56
    %s76 = sphi 0, %s78
    %s79 = sphi 0, %s76
    %s80 = sphi 0, %s79
    %s96 = sphi 0, %s80
    %s100 = sphi 0, %s100
    %s102 = sphi 0, %s100
    %s103 = sphi 0, %s102
    %s117 = sphi 0, %s103
    %s121 = sphi 0, %s121
    %s123 = sphi 0, %s121
    %s124 = sphi 0, %s123
    %s138 = sphi 0, %s124
    %s142 = sphi 0, %s142
    %s144 = sphi 0, %s142
    %s145 = sphi 0, %s144
    %s159 = sphi 0, %s145
    %s165 = sphi 0, %s167
    %s168 = sphi 0, %s165
    %s169 = sphi 0, %s168
    %s185 = sphi 0, %s169
  $region4: #{pooling_forward.1} parent=0 // loop_header_branch
    %15 = sbr.rel (%p13) target = $region8
  $region5: #{pooling_forward.1} parent=0 // loop_body
    %s17 = ssub.s32 %s12, 1
    %s18 = ssub.s32 %s12, 2
    %s25 = sadd.s32 1, %s20
    %p26 = scmp.ge.s32.totalorder %s25, 2
    %s27 = scalar_select %p26, 0, %s25
    %s28 = sadd.s32 1, %s19
    %s29 = scalar_select %p26, %s28, %s19
    %p30 = scmp.ge.s32.totalorder %s29, 2
    %s31 = scalar_select %p30, 0, %s29
    %s33 = sadd.s32 %s32, 1
    %p36 = scmp.eq.s32.totalorder %s12, 3
    %p37 = scmp.ne.s32.totalorder %s32, %s34
    %p38 = scmp.eq.s32.totalorder %s12, 0
    %p39 = por %p37, %p38
    %p40 = scmp.ne.s32.totalorder %s32, %s34
    %p41 = scmp.eq.s32.totalorder %s17, 3
    %p42 = por %p40, %p41
    %p43 = scmp.ne.s32.totalorder %s34, %s35
    %p44 = scmp.eq.s32.totalorder %s17, 0
    %p45 = por %p43, %p44
    %p46 = scmp.ne.s32.totalorder %s34, %s35
    %p47 = scmp.eq.s32.totalorder %s18, 3
    %p48 = por %p46, %p47
    %p50 = scmp.ne.s32.totalorder %s35, %s49
    %p51 = scmp.eq.s32.totalorder %s18, 0
    %p52 = por %p50, %p51
    %s54 = sadd.s32 %s53, 1
    %p57 = scmp.eq.s32.totalorder %s12, 3
    %p58 = scmp.ne.s32.totalorder %s53, %s55
    %p59 = scmp.eq.s32.totalorder %s12, 0
    %p60 = por %p58, %p59
    %p61 = scmp.ne.s32.totalorder %s53, %s55
    %p62 = scmp.eq.s32.totalorder %s17, 3
    %p63 = por %p61, %p62
    %p64 = scmp.ne.s32.totalorder %s55, %s56
    %p65 = scmp.eq.s32.totalorder %s17, 0
    %p66 = por %p64, %p65
    %p67 = scmp.ne.s32.totalorder %s55, %s56
    %p68 = scmp.eq.s32.totalorder %s18, 3
    %p69 = por %p67, %p68
    %p71 = scmp.ne.s32.totalorder %s56, %s70
    %p72 = scmp.eq.s32.totalorder %s18, 0
    %p73 = por %p71, %p72
    %s74 = ssub.s32 %s20, %s27
    %p75 = scmp.eq.s32.totalorder %s74, 0
    %s77 = sadd.s32 %s76, 1
    %s78 = scalar_select %p75, %s76, %s77
    %p81 = pneg %p75
    %p82 = scmp.eq.s32.totalorder %s12, 3
    %p83 = por %p81, %p82
    %p84 = scmp.ne.s32.totalorder %s76, %s79
    %p85 = scmp.eq.s32.totalorder %s12, 0
    %p86 = por %p84, %p85
    %p87 = scmp.ne.s32.totalorder %s76, %s79
    %p88 = scmp.eq.s32.totalorder %s17, 3
    %p89 = por %p87, %p88
    %p90 = scmp.ne.s32.totalorder %s79, %s80
    %p91 = scmp.eq.s32.totalorder %s17, 0
    %p92 = por %p90, %p91
    %p93 = scmp.ne.s32.totalorder %s79, %s80
    %p94 = scmp.eq.s32.totalorder %s18, 3
    %p95 = por %p93, %p94
    %p97 = scmp.ne.s32.totalorder %s80, %s96
    %p98 = scmp.eq.s32.totalorder %s18, 0
    %p99 = por %p97, %p98
    %s101 = sadd.s32 %s100, 1
    %p104 = scmp.eq.s32.totalorder %s12, 3
    %p105 = scmp.ne.s32.totalorder %s100, %s102
    %p106 = scmp.eq.s32.totalorder %s12, 0
    %p107 = por %p105, %p106
    %p108 = scmp.ne.s32.totalorder %s100, %s102
    %p109 = scmp.eq.s32.totalorder %s17, 3
    %p110 = por %p108, %p109
    %p111 = scmp.ne.s32.totalorder %s102, %s103
    %p112 = scmp.eq.s32.totalorder %s17, 0
    %p113 = por %p111, %p112
    %p114 = scmp.ne.s32.totalorder %s102, %s103
    %p115 = scmp.eq.s32.totalorder %s18, 3
    %p116 = por %p114, %p115
    %p118 = scmp.ne.s32.totalorder %s103, %s117
    %p119 = scmp.eq.s32.totalorder %s18, 0
    %p120 = por %p118, %p119
    %s122 = sadd.s32 %s121, 1
    %p125 = scmp.eq.s32.totalorder %s12, 3
    %p126 = scmp.ne.s32.totalorder %s121, %s123
    %p127 = scmp.eq.s32.totalorder %s12, 0
    %p128 = por %p126, %p127
    %p129 = scmp.ne.s32.totalorder %s121, %s123
    %p130 = scmp.eq.s32.totalorder %s17, 3
    %p131 = por %p129, %p130
    %p132 = scmp.ne.s32.totalorder %s123, %s124
    %p133 = scmp.eq.s32.totalorder %s17, 0
    %p134 = por %p132, %p133
    %p135 = scmp.ne.s32.totalorder %s123, %s124
    %p136 = scmp.eq.s32.totalorder %s18, 3
    %p137 = por %p135, %p136
    %p139 = scmp.ne.s32.totalorder %s124, %s138
    %p140 = scmp.eq.s32.totalorder %s18, 0
    %p141 = por %p139, %p140
    %s143 = sadd.s32 %s142, 1
    %p146 = scmp.eq.s32.totalorder %s12, 3
    %p147 = scmp.ne.s32.totalorder %s142, %s144
    %p148 = scmp.eq.s32.totalorder %s12, 0
    %p149 = por %p147, %p148
    %p150 = scmp.ne.s32.totalorder %s142, %s144
    %p151 = scmp.eq.s32.totalorder %s17, 3
    %p152 = por %p150, %p151
    %p153 = scmp.ne.s32.totalorder %s144, %s145
    %p154 = scmp.eq.s32.totalorder %s17, 0
    %p155 = por %p153, %p154
    %p156 = scmp.ne.s32.totalorder %s144, %s145
    %p157 = scmp.eq.s32.totalorder %s18, 3
    %p158 = por %p156, %p157
    %p160 = scmp.ne.s32.totalorder %s145, %s159
    %p161 = scmp.eq.s32.totalorder %s18, 0
    %p162 = por %p160, %p161
    %s163 = ssub.s32 %s20, %s27
    %p164 = scmp.eq.s32.totalorder %s163, 0
    %s166 = sadd.s32 %s165, 1
    %s167 = scalar_select %p164, %s165, %s166
    %p170 = pneg %p164
    %p171 = scmp.eq.s32.totalorder %s12, 3
    %p172 = por %p170, %p171
    %p173 = scmp.ne.s32.totalorder %s165, %s168
    %p174 = scmp.eq.s32.totalorder %s12, 0
    %p175 = por %p173, %p174
    %p176 = scmp.ne.s32.totalorder %s165, %s168
    %p177 = scmp.eq.s32.totalorder %s17, 3
    %p178 = por %p176, %p177
    %p179 = scmp.ne.s32.totalorder %s168, %s169
    %p180 = scmp.eq.s32.totalorder %s17, 0
    %p181 = por %p179, %p180
    %p182 = scmp.ne.s32.totalorder %s168, %s169
    %p183 = scmp.eq.s32.totalorder %s18, 3
    %p184 = por %p182, %p183
    %p186 = scmp.ne.s32.totalorder %s169, %s185
    %p187 = scmp.eq.s32.totalorder %s18, 0
    %p188 = por %p186, %p187
    %p189 = scmp.le.s32.totalorder 1, %s12
    %p190 = scmp.lt.s32.totalorder %s12, 5
    %p191 = pnand %p189, %p190
    %p192 = pneg %p191
    // Predicated region
    $region9: #{pooling_forward.1} parent=5 // pred_check
      _
    $region10: #{pooling_forward.1} parent=5 // pred_check_branch
      %194 = sbr.rel (%p191) target = $region12
    $region11: #{pooling_forward.1} parent=5 // pred_region
      %s195 = ssub.s32 %s12, 1
      // Predicated region
      $region13: #{pooling_forward.1} parent=11 // pred_check
        %p196 = pneg %p45
      $region14: #{pooling_forward.1} parent=11 // pred_check_branch
        %198 = sbr.rel (%p196) target = $region16
      $region15: #{pooling_forward.1} parent=11 // pred_region
        _
      $region16: #{pooling_forward.1} parent=11 // pred_fallthru
        _
      // Predicated region
      $region17: #{pooling_forward.1} parent=11 // pred_check
        %p199 = pneg %p66
      $region18: #{pooling_forward.1} parent=11 // pred_check_branch
        %201 = sbr.rel (%p199) target = $region20
      $region19: #{pooling_forward.1} parent=11 // pred_region
        _
      $region20: #{pooling_forward.1} parent=11 // pred_fallthru
        _
      // Predicated region
      $region21: #{pooling_forward.1} parent=11 // pred_check
        %p202 = pneg %p113
      $region22: #{pooling_forward.1} parent=11 // pred_check_branch
        %204 = sbr.rel (%p202) target = $region24
      $region23: #{pooling_forward.1} parent=11 // pred_region
        _
      $region24: #{pooling_forward.1} parent=11 // pred_fallthru
        _
      // Predicated region
      $region25: #{pooling_forward.1} parent=11 // pred_check
        %p205 = pneg %p134
      $region26: #{pooling_forward.1} parent=11 // pred_check_branch
        %207 = sbr.rel (%p205) target = $region28
      $region27: #{pooling_forward.1} parent=11 // pred_region
        _
      $region28: #{pooling_forward.1} parent=11 // pred_fallthru
        _
      // Predicated region
      $region29: #{pooling_forward.1} parent=11 // pred_check
        %p208 = pneg %p155
      $region30: #{pooling_forward.1} parent=11 // pred_check_branch
        %210 = sbr.rel (%p208) target = $region32
      $region31: #{pooling_forward.1} parent=11 // pred_region
        _
      $region32: #{pooling_forward.1} parent=11 // pred_fallthru
        _
    $region12: #{pooling_forward.1} parent=5 // pred_fallthru
      _
    %p211 = scmp.lt.s32.totalorder %s12, 4
    // Predicated region
    $region33: #{pooling_forward.1} parent=5 // pred_check
      %p212 = pneg %p211
    $region34: #{pooling_forward.1} parent=5 // pred_check_branch
      %214 = sbr.rel (%p212) target = $region36
    $region35: #{pooling_forward.1} parent=5 // pred_region
      // Predicated region
      $region37: #{pooling_forward.1} parent=35 // pred_check
        %p215 = pneg %p86
      $region38: #{pooling_forward.1} parent=35 // pred_check_branch
        %217 = sbr.rel (%p215) target = $region40
      $region39: #{pooling_forward.1} parent=35 // pred_region
        %s218 = smul.u32 2, %s20
        %p219 = scmp.lt.s32.totalorder %s218, 3
        %s220 = scalar_select %p219, %s218, 3
        %s221 = smul.addr %s220, 8
        %s222 = scalar_lea.vmem %s2, %s221
        %s223 = smul.u32 2, %s20
      $region40: #{pooling_forward.1} parent=35 // pred_fallthru
        _
    $region36: #{pooling_forward.1} parent=5 // pred_fallthru
      _
    %p224 = scmp.le.s32.totalorder 1, %s12
    %p225 = scmp.lt.s32.totalorder %s12, 5
    %p226 = pnand %p224, %p225
    %p227 = pneg %p226
    // Predicated region
    $region41: #{pooling_forward.1} parent=5 // pred_check
      _
    $region42: #{pooling_forward.1} parent=5 // pred_check_branch
      %229 = sbr.rel (%p226) target = $region44
    $region43: #{pooling_forward.1} parent=5 // pred_region
      %s230 = ssub.s32 %s12, 1
      %p231 = pneg %p45
      %p232 = pneg %p42
      %p233 = pneg %p66
      %p234 = pneg %p63
      %s235 = smul.u32 2, %s22
      %p236 = scmp.lt.s32.totalorder %s235, 3
      %s237 = scalar_select %p236, %s235, 3
      %s238 = smul.addr %s237, 8
      %s239 = scalar_lea.vmem %s2, %s238
      %p240 = pneg %p92
      %p241 = pneg %p89
      %p242 = pneg %p113
      %p243 = pneg %p110
      %p244 = pneg %p134
      %p245 = pneg %p131
      %p246 = pneg %p155
      %p247 = pneg %p152
      %p248 = pneg %p181
      %p249 = pneg %p178
      %s250 = smul.u32 2, %s22
      %p251 = scmp.lt.s32.totalorder %s250, 3
      %s252 = scalar_select %p251, %s250, 3
      %s253 = smul.addr %s252, 8
      %s254 = scalar_lea.vmem %s6, %s253
      %s255 = smul.u32 2, %s22
      %p256 = scmp.lt.s32.totalorder %s255, 3
      %s257 = scalar_select %p256, %s255, 3
      %s258 = smul.addr %s257, 8
      %s259 = scalar_lea.vmem %s2, %s258
      %s260 = smul.u32 2, %s22
      %s261 = smul.u32 2, %s22
      %p262 = scmp.lt.s32.totalorder %s261, 3
      %s263 = scalar_select %p262, %s261, 3
      %s264 = smul.addr %s263, 8
      %s265 = scalar_lea.vmem %s6, %s264
      %s266 = smul.u32 2, %s22
      %v267 = vld [vmem:[%s259] sm:$0xff]
      %v268 = vld [vmem:[%s259 + $0x8] sm:$0xff]
      %v269 = vmax.f32 %v267, 0.0
      %v270 = vmax.f32 %v268, 0.0
      %v271 = vld [vmem:[%s3] sm:$0xff]
      %v272 = vld [vmem:[%s3 + $0x8] sm:$0xff]
      %v273 = vld [vmem:[%s3 + $0x10] sm:$0xff]
      %v274 = vld [vmem:[%s3 + $0x18] sm:$0xff]
      %v275 = vld [vmem:[%s3 + $0x20] sm:$0xff]
      %v276 = vld [vmem:[%s3 + $0x28] sm:$0xff]
      %v277 = vld [vmem:[%s3 + $0x30] sm:$0xff]
      %v278 = vld [vmem:[%s3 + $0x38] sm:$0xff]
      %vm279 = vcmask 523264
      %v281 = vsel %vm279, %v269, 0
      %v284 = vsel %vm279, %v270, 0
      %286 = vmatprep.subr.mxu0 0.0
      %287 = vmatpush1.msra.mxu0 %v271
      %288 = vmatprep.subr.mxu0 0.0
      %289 = vmatpush1.msra.mxu0 %v272
      %290 = vmatprep.subr.mxu0 0.0
      %291 = vmatpush1.msra.mxu0 %v273
      %292 = vmatprep.subr.mxu0 0.0
      %293 = vmatpush1.msra.mxu0 %v274
      %294 = vmatprep.subr.mxu0 0.0
      %295 = vmatpush1.msra.mxu0 %v275
      %296 = vmatprep.subr.mxu0 0.0
      %297 = vmatpush1.msra.mxu0 %v276
      %298 = vmatprep.subr.mxu0 0.0
      %299 = vmatpush1.msra.mxu0 %v277
      %300 = vmatprep.subr.mxu0 0.0
      %301 = vmatpush1.msra.mxu0 %v278
      %302 = vmatprep.subr.mxu0 0.0
      %303 = vmatpush1.msra.mxu0 0.0
      %304 = vmatprep.subr.mxu0 0.0
      %305 = vmatpush1.msra.mxu0 0.0
      %306 = vmatprep.subr.mxu0 0.0
      %307 = vmatpush1.msra.mxu0 0.0
      %308 = vmatprep.subr.mxu0 0.0
      %309 = vmatpush1.msra.mxu0 0.0
      %310 = vmatprep.subr.mxu0 0.0
      %311 = vmatpush1.msra.mxu0 0.0
      %312 = vmatprep.subr.mxu0 0.0
      %313 = vmatpush1.msra.mxu0 0.0
      %314 = vmatprep.subr.mxu0 0.0
      %315 = vmatpush1.msra.mxu0 0.0
      %316 = vmatprep.subr.mxu0 0.0
      %317 = vmatpush1.msra.mxu0 0.0
      %318 = vmatprep.subr.mxu0 0.0
      %319 = vmatpush1.msra.mxu0 0.0
      %320 = vmatprep.subr.mxu0 0.0
      %321 = vmatpush1.msra.mxu0 0.0
      %322 = vmatprep.subr.mxu0 0.0
      %323 = vmatpush1.msra.mxu0 0.0
      %324 = vmatprep.subr.mxu0 0.0
      %325 = vmatpush1.msra.mxu0 0.0
      %326 = vmatprep.subr.mxu0 0.0
      %327 = vmatpush1.msra.mxu0 0.0
      %328 = vmatprep.subr.mxu0 0.0
      %329 = vmatpush1.msra.mxu0 0.0
      %330 = vmatprep.subr.mxu0 0.0
      %331 = vmatpush1.msra.mxu0 0.0
      %332 = vmatprep.subr.mxu0 0.0
      %333 = vmatpush1.msra.mxu0 0.0
      %334 = vmatprep.subr.mxu0 0.0
      %335 = vmatpush1.msra.mxu0 0.0
      %336 = vmatprep.subr.mxu0 0.0
      %337 = vmatpush1.msra.mxu0 0.0
      %338 = vmatprep.subr.mxu0 0.0
      %339 = vmatpush1.msra.mxu0 0.0
      %340 = vmatprep.subr.mxu0 0.0
      %341 = vmatpush1.msra.mxu0 0.0
      %342 = vmatprep.subr.mxu0 0.0
      %343 = vmatpush1.msra.mxu0 0.0
      %344 = vmatprep.subr.mxu0 0.0
      %345 = vmatpush1.msra.mxu0 0.0
      %346 = vmatprep.subr.mxu0 0.0
      %347 = vmatpush1.msra.mxu0 0.0
      %348 = vmatprep.subr.mxu0 0.0
      %349 = vmatpush1.msra.mxu0 0.0
      %350 = vmatprep.mubr.f32.mxu0 0.0
      %351 = vmatmul.mubr.f32.gmra.mrb[0].mxu0 %v281
      %v352 = vpop.f32.mrb[0].mxu0
      %v353 = vadd.f32 0.0, %v352
      %v354 = vpop.f32.mrb[0].mxu0
      %355 = vmatprep.mubr.f32.mxu0 0.0
      %356 = vmatmul.mubr.f32.gmra.mrb[0].mxu0 %v284
      %v357 = vpop.f32.mrb[0].mxu0
      %v358 = vadd.f32 0.0, %v357
      %v359 = vpop.f32.mrb[0].mxu0
      %360 = vdwg.mxu0
      %p361 = scmp.eq.s32.totalorder %s21, 0
      %p362 = scmp.eq.s32.totalorder %s22, 0
      %p363 = pnand %p361, %p362
      %p364 = pneg %p363
      // Predicated region
      $region45: #{pooling_forward.1} parent=43 // pred_check
        _
      $region46: #{pooling_forward.1} parent=43 // pred_check_branch
        %366 = sbr.rel (%p363) target = $region48
      $region47: #{pooling_forward.1} parent=43 // pred_region
        %367 = vst [vmem:[#allocation2] sm:$0x1] 0.0
        %368 = vst [vmem:[#allocation3] sm:$0x1] 0.0
      $region48: #{pooling_forward.1} parent=43 // pred_fallthru
        _
      // Predicated region
      $region49: #{pooling_forward.1} parent=43 // pred_check
        %p369 = pneg %p361
      $region50: #{pooling_forward.1} parent=43 // pred_check_branch
        %371 = sbr.rel (%p369) target = $region52
      $region51: #{pooling_forward.1} parent=43 // pred_region
        %v372 = vld [vmem:[#allocation2] sm:$0x1]
        %v373 = vadd.f32 %v353, %v358
        %v374 = vrot.slane %v373, 4
        %v375 = vadd.f32 %v373, %v374
        %v376 = vrot.slane %v375, 2
        %v377 = vadd.f32 %v375, %v376
        %v378 = vrot.slane %v377, 1
        %v379 = vadd.f32 %v377, %v378
        %v380 = vadd.f32 %v372, %v379
        %381 = vst [vmem:[#allocation2] sm:$0x1] %v380
        %v382 = vld [vmem:[#allocation3] sm:$0x1]
        %v383 = vmul.f32 %v353, %v353
        %v384 = vmul.f32 %v358, %v358
        %v385 = vadd.f32 %v383, %v384
        %v386 = vrot.slane %v385, 4
        %v387 = vadd.f32 %v385, %v386
        %v388 = vrot.slane %v387, 2
        %v389 = vadd.f32 %v387, %v388
        %v390 = vrot.slane %v389, 1
        %v391 = vadd.f32 %v389, %v390
        %v392 = vadd.f32 %v382, %v391
        %393 = vst [vmem:[#allocation3] sm:$0x1] %v392
      $region52: #{pooling_forward.1} parent=43 // pred_fallthru
        _
      %p394 = scmp.eq.s32.totalorder %s21, 1
      // Predicated region
      $region53: #{pooling_forward.1} parent=43 // pred_check
        %p395 = pneg %p394
      $region54: #{pooling_forward.1} parent=43 // pred_check_branch
        %397 = sbr.rel (%p395) target = $region56
      $region55: #{pooling_forward.1} parent=43 // pred_region
        %v398 = vld [vmem:[#allocation2] sm:$0x1]
        %399 = vrot.lane.b32.xlu0 %v398, 8
        %v400 = vpop.permute.xlu0 %399
        %v401 = vadd.f32 %v398, %v400
        %402 = vrot.lane.b32.xlu0 %v401, 16
        %v403 = vpop.permute.xlu0 %402
        %v404 = vadd.f32 %v401, %v403
        %405 = vrot.lane.b32.xlu0 %v404, 32
        %v406 = vpop.permute.xlu0 %405
        %v407 = vadd.f32 %v404, %v406
        %408 = vrot.lane.b32.xlu0 %v407, 64
        %v409 = vpop.permute.xlu0 %408
        %v410 = vadd.f32 %v407, %v409
        %v411 = vld [vmem:[#allocation3] sm:$0x1]
        %412 = vrot.lane.b32.xlu0 %v411, 8
        %v413 = vpop.permute.xlu0 %412
        %v414 = vadd.f32 %v411, %v413
        %415 = vrot.lane.b32.xlu0 %v414, 16
        %v416 = vpop.permute.xlu0 %415
        %v417 = vadd.f32 %v414, %v416
        %418 = vrot.lane.b32.xlu0 %v417, 32
        %v419 = vpop.permute.xlu0 %418
        %v420 = vadd.f32 %v417, %v419
        %421 = vrot.lane.b32.xlu0 %v420, 64
        %v422 = vpop.permute.xlu0 %421
        %v423 = vadd.f32 %v420, %v422
        %v424 = vmul.f32 %v410, 0.001953125
        %v425 = vmul.f32 %v423, 0.001953125
        %v426 = vmul.f32 %v424, %v424
        %v427 = vsub.f32 %v425, %v426
        %v428 = vmax.f32 %v427, 0.0
        %v429 = vld [vmem:[%s4] sm:$0x1]
        %v430 = vadd.f32 %v428, 1e-05
        %v431 = vrsqrt.pop %v430
        %v432 = vmul.f32 %v429, %v431
        %v433 = vld [vmem:[%s5] sm:$0x1]
        %v434 = vmul.f32 %v424, %v432
        %v435 = vsub.f32 %v433, %v434
        %v437 = vlaneseq
        %v438 = vshrl.u32 %v437, 7
        %v439 = vsub.s32 0, %v438
        %v440 = vrot.slane %v432, %v439
        %v442 = vmul.f32 %v353, %v440
        %v443 = vmul.f32 %v358, %v440
        %v445 = vlaneseq
        %v446 = vshrl.u32 %v445, 7
        %v447 = vsub.s32 0, %v446
        %v448 = vrot.slane %v435, %v447
        %v450 = vadd.f32 %v442, %v448
        %v451 = vadd.f32 %v443, %v448
        %v452 = vld [vmem:[%s0] sm:$0xff]
        %v453 = vld [vmem:[%s0 + $0x8] sm:$0xff]
        %v454 = vld [vmem:[%s1] sm:$0x1]
        %455 = vrot.lane.b32.xlu0 %v450, 8
        %v456 = vpop.permute.xlu0 %455
        %457 = vrot.lane.b32.xlu0 %v451, 8
        %v458 = vpop.permute.xlu0 %457
        %459 = vrot.lane.b32.xlu0 %v454, 8
        %v460 = vpop.permute.xlu0 %459
        %v461 = vsub.f32 %v460, %v454
        %v462 = vand.u32 2147483647, %v461
        %vm463 = vcmp.eq.f32.partialorder %v462, 1.0
        %v464 = vsel %vm463, 1, 0
        %v465 = vlaneseq
        %v466 = vshrl.u32 %v465, 7
        %v467 = vsub.s32 0, %v466
        %v468 = vrot.slane %v464, %v467
        %vm469 = vcmp.eq.s32.totalorder %v468, 1
        %v470 = vsel %vm469, %v456, 0.0
        %v471 = vsel %vm469, %v458, 0.0
        %v472 = vadd.f32 %v450, %v470
        %v473 = vadd.f32 %v451, %v471
        %v474 = vcvt.s32.f32 %v464
        %v475 = vadd.f32 %v474, 1.0
        %476 = vrot.lane.b32.xlu0 %v450, 120
        %v477 = vpop.permute.xlu0 %476
        %478 = vrot.lane.b32.xlu0 %v451, 120
        %v479 = vpop.permute.xlu0 %478
        %480 = vrot.lane.b32.xlu0 %v454, 120
        %v481 = vpop.permute.xlu0 %480
        %v482 = vsub.f32 %v481, %v454
        %v483 = vand.u32 2147483647, %v482
        %vm484 = vcmp.eq.f32.partialorder %v483, 1.0
        %v485 = vsel %vm484, 1, 0
        %v486 = vlaneseq
        %v487 = vshrl.u32 %v486, 7
        %v488 = vsub.s32 0, %v487
        %v489 = vrot.slane %v485, %v488
        %vm490 = vcmp.eq.s32.totalorder %v489, 1
        %v491 = vsel %vm490, %v477, 0.0
        %v492 = vsel %vm490, %v479, 0.0
        %v493 = vadd.f32 %v472, %v491
        %v494 = vadd.f32 %v473, %v492
        %v495 = vcvt.s32.f32 %v485
        %v496 = vadd.f32 %v475, %v495
        %v497 = vrot.slane %v493, 7
        %v498 = vrot.slane %v494, 7
        %v499 = vlaneseq
        %v500 = vshrl.u32 %v499, 7
        %vm501 = vcmp.lt.s32.totalorder %v500, 1
        %v502 = vsel %vm501, %v497, %v498
        %v503 = vsel %vm501, %v498, %v497
        %v504 = vrot.slane %v452, 7
        %v505 = vrot.slane %v453, 7
        %v506 = vsel %vm501, %v504, %v505
        %v507 = vsel %vm501, %v505, %v504
        %v508 = vsub.f32 %v507, %v452
        %v509 = vsub.f32 %v506, %v453
        %v510 = vand.u32 2147483647, %v508
        %v511 = vand.u32 2147483647, %v509
        %vm512 = vcmp.eq.f32.partialorder %v510, 1.0
        %vm513 = vcmp.eq.f32.partialorder %v511, 1.0
        %v514 = vsel %vm512, 1, 0
        %v515 = vsel %vm513, 1, 0
        %516 = vset.pattern.permute.xlu0 0
        %517 = vperm.xlu0 %516, %v514
        %v518 = vpop.permute.xlu0 %517
        %519 = vset.pattern.permute.xlu0 0
        %520 = vperm.xlu0 %519, %v515
        %v521 = vpop.permute.xlu0 %520
        %vm522 = vcmp.eq.s32.totalorder %v518, 1
        %vm523 = vcmp.eq.s32.totalorder %v521, 1
        %v524 = vsel %vm522, %v503, 0.0
        %v525 = vsel %vm523, %v502, 0.0
        %v526 = vadd.f32 %v493, %v524
        %v527 = vadd.f32 %v494, %v525
        %v528 = vcvt.s32.f32 %v514
        %v529 = vcvt.s32.f32 %v515
        %v530 = vadd.f32 %v528, 1.0
        %v531 = vadd.f32 %v529, 1.0
        %v532 = vrot.slane %v493, 1
        %v533 = vrot.slane %v494, 1
        %vm534 = vcmp.lt.s32.totalorder %v500, 7
        %v535 = vsel %vm534, %v532, %v533
        %v536 = vsel %vm534, %v533, %v532
        %v537 = vrot.slane %v452, 1
        %v538 = vrot.slane %v453, 1
        %v539 = vsel %vm534, %v537, %v538
        %v540 = vsel %vm534, %v538, %v537
        %v541 = vsub.f32 %v539, %v452
        %v542 = vsub.f32 %v540, %v453
        %v543 = vand.u32 2147483647, %v541
        %v544 = vand.u32 2147483647, %v542
        %vm545 = vcmp.eq.f32.partialorder %v543, 1.0
        %vm546 = vcmp.eq.f32.partialorder %v544, 1.0
        %v547 = vsel %vm545, 1, 0
        %v548 = vsel %vm546, 1, 0
        %549 = vset.pattern.permute.xlu0 0
        %550 = vperm.xlu0 %549, %v547
        %v551 = vpop.permute.xlu0 %550
        %552 = vset.pattern.permute.xlu0 0
        %553 = vperm.xlu0 %552, %v548
        %v554 = vpop.permute.xlu0 %553
        %vm555 = vcmp.eq.s32.totalorder %v551, 1
        %vm556 = vcmp.eq.s32.totalorder %v554, 1
        %v557 = vsel %vm555, %v535, 0.0
        %v558 = vsel %vm556, %v536, 0.0
        %v559 = vadd.f32 %v526, %v557
        %v560 = vadd.f32 %v527, %v558
        %v561 = vcvt.s32.f32 %v547
        %v562 = vcvt.s32.f32 %v548
        %v563 = vadd.f32 %v530, %v561
        %v564 = vadd.f32 %v531, %v562
        %v565 = vrcp.pop %v496
        %v566 = vmul.f32 1.0, %v565
        %v567 = vlaneseq
        %v568 = vshrl.u32 %v567, 7
        %v569 = vsub.s32 0, %v568
        %v570 = vrot.slane %v566, %v569
        %v571 = vmul.f32 %v559, %v570
        %v572 = vmul.f32 %v560, %v570
        %v573 = vrcp.pop %v563
        %v574 = vmul.f32 1.0, %v573
        %v575 = vrcp.pop %v564
        %v576 = vmul.f32 1.0, %v575
        %578 = vset.pattern.permute.xlu0 0
        %579 = vperm.xlu0 %578, %v574
        %v580 = vpop.permute.xlu0 %579
        %583 = vset.pattern.permute.xlu0 0
        %584 = vperm.xlu0 %583, %v576
        %v585 = vpop.permute.xlu0 %584
        %v587 = vmul.f32 %v571, %v580
        %v588 = vmul.f32 %v572, %v585
        %589 = vst [vmem:[%s265] sm:$0xff] %v587
        %590 = vst [vmem:[%s265 + $0x8] sm:$0xff] %v588
      $region56: #{pooling_forward.1} parent=43 // pred_fallthru
        _
      %s591 = smul.u32 2, %s22
      %p592 = scmp.lt.s32.totalorder %s591, 3
      %s593 = scalar_select %p592, %s591, 3
      %s594 = smul.addr %s593, 8
      %s595 = scalar_lea.vmem %s6, %s594
      // Predicated region
      $region57: #{pooling_forward.1} parent=43 // pred_check
        %p596 = pneg %p178
      $region58: #{pooling_forward.1} parent=43 // pred_check_branch
        %598 = sbr.rel (%p596) target = $region60
      $region59: #{pooling_forward.1} parent=43 // pred_region
        %s599 = smul.u32 2, %s22
      $region60: #{pooling_forward.1} parent=43 // pred_fallthru
        _
    $region44: #{pooling_forward.1} parent=5 // pred_fallthru
      _
    %p600 = scmp.le.s32.totalorder 2, %s12
    // Predicated region
    $region61: #{pooling_forward.1} parent=5 // pred_check
      %p601 = pneg %p600
    $region62: #{pooling_forward.1} parent=5 // pred_check_branch
      %603 = sbr.rel (%p601) target = $region64
    $region63: #{pooling_forward.1} parent=5 // pred_region
      %s604 = ssub.s32 %s12, 2
      // Predicated region
      $region65: #{pooling_forward.1} parent=63 // pred_check
        %p605 = pneg %p184
      $region66: #{pooling_forward.1} parent=63 // pred_check_branch
        %607 = sbr.rel (%p605) target = $region68
      $region67: #{pooling_forward.1} parent=63 // pred_region
        %s608 = smul.u32 2, %s24
        %p609 = scmp.lt.s32.totalorder %s608, 3
        %s610 = scalar_select %p609, %s608, 3
        %s611 = smul.addr %s610, 8
        %s612 = scalar_lea.vmem %s6, %s611
      $region68: #{pooling_forward.1} parent=63 // pred_fallthru
        _
    $region64: #{pooling_forward.1} parent=5 // pred_fallthru
      _
  $region6: #{pooling_forward.1} parent=0 // loop_footer
    %s16 = sadd.s32 1, %s12
  $region7: #{pooling_forward.1} parent=0 // loop_footer_branch
    %11 = sbr.rel target = $region3
  $region8: #{pooling_forward.1} parent=0 // loop_exit
    _

</llo_original>
